<compile_context>
chip_gen: v7x
topology: tpu7x:2x2x1
jax: 0.10.0
libtpu: 0.0.40
codegen_flags: <defaults>
</compile_context>

<pallas_src>
import jax
import jax.numpy as jnp
from jax.experimental import pallas as pl
from jax.experimental.pallas import tpu as pltpu

EPS = 1e-5  # torch.nn.LayerNorm default eps


# --------------------------------------------------------------------------- #
# Kernel body
# --------------------------------------------------------------------------- #
def _fused_body(x_ref, lnp_ref, fb1_ref, w1_ref, w2_ref, o_ref, gmat,
                gelu_approximate):
    """Fused: y1 = x + LN1(x); out = y1 + fc2(GELU(fc1(LN2(y1))))."""
    x = x_ref[...]                          # (tm, Cw) f32
    lnp = lnp_ref[...]                      # (5, Cw): g1, b1, g2, b2, fc2-bias
    g1, b1, g2, b2, fb2 = (lnp[i:i + 1, :] for i in range(5))

    def layer_norm(v, gamma, beta):
        # Two-pass variance (E[(v-mu)^2]) — matches nn.LayerNorm and avoids
        # catastrophic cancellation of the single-pass form.
        if gmat is None:
            mu = jnp.mean(v, axis=-1, keepdims=True)
            d = v - mu
            var = jnp.mean(d * d, axis=-1, keepdims=True)
        else:
            # Lane-packed path: per-token segmented mean via a block-diagonal
            # averaging matrix.  Keeps every op 128-lane dense; the two tiny
            # extra matmuls ride on the otherwise idle MXU.
            mu = jnp.dot(v, gmat, preferred_element_type=jnp.float32)
            d = v - mu
            var = jnp.dot(d * d, gmat, preferred_element_type=jnp.float32)
        return d * jax.lax.rsqrt(var + EPS) * gamma + beta

    # norm1; the module's roll(-s,-s)/roll(+s,+s) pair cancels exactly
    # (nothing happens between the two shifts), so token mixing is identity.
    y1 = x + layer_norm(x, g1, b1)

    # norm2 -> fc1 -> GELU -> fc2 -> residual
    ln2 = layer_norm(y1, g2, b2)
    mm_dtype = w1_ref.dtype                 # f32 for small dims, bf16 for large
    h = jnp.dot(ln2.astype(mm_dtype), w1_ref[...],
                preferred_element_type=jnp.float32) + fb1_ref[...]
    # tanh GELU -> EUP slot (free); erf would be a VALU polynomial on the
    # largest elementwise tensor.  gelu_approximate=False gives exact parity.
    h = jax.nn.gelu(h, approximate=gelu_approximate)
    out = y1 + jnp.dot(h.astype(mm_dtype), w2_ref[...],
                       preferred_element_type=jnp.float32) + fb2
    o_ref[...] = out.astype(o_ref.dtype)


# --------------------------------------------------------------------------- #
# Generation-aware sizing helpers
# --------------------------------------------------------------------------- #
def _tpu_generation_info():
    """(num_tensorcores_per_chip, vmem_limit_bytes) from the attached device."""
    kind = ""
    try:
        kind = jax.devices()[0].device_kind.lower()
    except Exception:
        pass
    is_v7 = "v7" in kind
    # v7x has 2 TensorCores per chip; v4/v5p are megacore; v5e/v6e have 1 TC.
    num_tc = 2 if (is_v7 or "v4" in kind or "v5p" in kind) else 1
    phys_vmem = (64 if is_v7 else 128) * 1024 * 1024
    vmem_limit = min(int(phys_vmem * 0.75), 100 * 1024 * 1024)  # 48 MiB on v7x
    return num_tc, vmem_limit


def _choose_tile_rows(n_rows, packed_c, packed_h, num_tc, vmem_limit_bytes):
    """Largest row tile that fits VMEM; only split the grid to feed >1 TC."""
    # Per-row f32 footprint: double-buffered in/out tiles + y1/ln2 + fc1 act.
    per_row_bytes = 4 * (4 * packed_c + 2 * packed_c + packed_h)
    budget = int(vmem_limit_bytes * 0.6)          # headroom for weights etc.
    cap = (budget // max(per_row_bytes, 1)) // 8 * 8
    cap = max(8, min(cap, 1024))
    if num_tc <= 1:
        tm = cap                                   # no reason to split small N
    else:
        tm = min(cap, -(-n_rows // num_tc))        # >= num_tc steps (v7x TCs)
        tm = max(8, (tm // 8) * 8)
    return n_rows if tm >= n_rows else tm


# --------------------------------------------------------------------------- #
# One-time parameter preparation (NOT per forward call)
# --------------------------------------------------------------------------- #
def prepare_params(raw, *, pack=None, use_bf16_weights=None):
    """Pack/tile/cast parameters once.

    * packs `pack` tokens per 128-lane row when C < 128 (lane-dense I/O),
    * builds block-diagonal fc weights so the MXU sees K = pack*C,
    * casts matmul weights to bf16 only when dims are large enough for MXU
      throughput to matter.
    """
    C, Hd = raw["w1"].shape
    if pack is None:
        pack = 128 // C if (C < 128 and 128 % C == 0) else 1
    if use_bf16_weights is None:
        use_bf16_weights = max(C, Hd) >= 512

    eye = jnp.eye(pack, dtype=jnp.float32)
    w1 = jnp.kron(eye, raw["w1"])                    # (pack*C, pack*Hd)
    w2 = jnp.kron(eye, raw["w2"])                    # (pack*Hd, pack*C)
    if use_bf16_weights:
        w1 = w1.astype(jnp.bfloat16)
        w2 = w2.astype(jnp.bfloat16)

    tile_c = lambda a: jnp.tile(a, (1, pack))        # (1, C) -> (1, pack*C)
    lnp = jnp.concatenate([tile_c(raw["g1"]), tile_c(raw["be1"]),
                           tile_c(raw["g2"]), tile_c(raw["be2"]),
                           tile_c(raw["fb2"])], axis=0)          # (5, pack*C)
    fb1 = jnp.tile(raw["fb1"], (1, pack))            # (1, pack*Hd)

    gmat = None
    if pack > 1:
        # (x @ gmat) broadcasts each token's mean to that token's C lanes.
        gmat = jnp.kron(eye, jnp.full((C, C), 1.0 / C, jnp.float32))

    return dict(pack=pack, lnp=lnp, fb1=fb1, w1=w1, w2=w2, gmat=gmat)


# --------------------------------------------------------------------------- #
# Forward wrapper
# --------------------------------------------------------------------------- #
def bi_transformer_block(x, prep, *, gelu_approximate=True):
    """x: (B, L, C) float32.  prep: output of prepare_params.  -> (B, L, C)."""
    B, L, C = x.shape
    P = prep["pack"]
    Cw = C * P
    Hw = prep["w1"].shape[1]
    N = B * L
    if N % P != 0:
        # TODO(synk): pad the ragged tail instead of refusing; for now build
        # the params with prepare_params(raw, pack=1) in that case.
        raise ValueError(f"B*L={N} must be divisible by pack={P}")
    n_rows = N // P
    x2 = x.reshape(n_rows, Cw)       # contiguous reinterpretation; free

    num_tc, vmem_limit = _tpu_generation_info()
    tm = _choose_tile_rows(n_rows, Cw, Hw, num_tc, vmem_limit)
    grid = (pl.cdiv(n_rows, tm),)

    row_spec = pl.BlockSpec((tm, Cw), lambda i: (i, 0))

    # Grid-invariant parameter blocks: single-buffered (no 2-deep pipeline).
    def const(arr):
        return pl.BlockSpec(arr.shape, lambda i: (0, 0),
                            pipeline_mode=pl.Buffered(1))

    in_specs = [row_spec, const(prep["lnp"]), const(prep["fb1"]),
                const(prep["w1"]), const(prep["w2"])]
    args = [x2, prep["lnp"], prep["fb1"], prep["w1"], prep["w2"]]

    if P > 1:
        in_specs.append(const(prep["gmat"]))
        args.append(prep["gmat"])

        def kernel(x_ref, lnp_ref, fb1_ref, w1_ref, w2_ref, gmat_ref, o_ref):
            _fused_body(x_ref, lnp_ref, fb1_ref, w1_ref, w2_ref, o_ref,
                        gmat_ref[...], gelu_approximate)
    else:
        def kernel(x_ref, lnp_ref, fb1_ref, w1_ref, w2_ref, o_ref):
            _fused_body(x_ref, lnp_ref, fb1_ref, w1_ref, w2_ref, o_ref,
                        None, gelu_approximate)

    out = pl.pallas_call(
        kernel,
        out_shape=jax.ShapeDtypeStruct((n_rows, Cw), x.dtype),
        grid_spec=pltpu.PrefetchScalarGridSpec(
            num_scalar_prefetch=0,
            grid=grid,
            in_specs=in_specs,
            out_specs=row_spec,
        ),
        compiler_params=pltpu.CompilerParams(
            dimension_semantics=("parallel",),
            vmem_limit_bytes=vmem_limit,
        ),
    )(*args)

    return out.reshape(B, L, C)


# --------------------------------------------------------------------------- #
# Parameters, reference, test
# --------------------------------------------------------------------------- #
def init_params(key, dim, mlp_hidden):
    k1, k2, k3, k4 = jax.random.split(key, 4)
    return dict(
        g1=jnp.ones((1, dim), jnp.float32),
        be1=jnp.zeros((1, dim), jnp.float32),
        g2=jnp.ones((1, dim), jnp.float32),
        be2=jnp.zeros((1, dim), jnp.float32),
        w1=jax.random.normal(k1, (dim, mlp_hidden), jnp.float32) * 0.02,
        fb1=jax.random.normal(k2, (1, mlp_hidden), jnp.float32) * 0.02,
        w2=jax.random.normal(k3, (mlp_hidden, dim), jnp.float32) * 0.02,
        fb2=jax.random.normal(k4, (1, dim), jnp.float32) * 0.02,
    )


def reference(x, raw):
    """Pure-JAX f32 reference of the PyTorch forward (exact erf GELU)."""
    hi = jax.lax.Precision.HIGHEST

    def ln(v, g, b):
        mu = jnp.mean(v, axis=-1, keepdims=True)
        var = jnp.mean((v - mu) ** 2, axis=-1, keepdims=True)
        return (v - mu) * jax.lax.rsqrt(var + EPS) * g + b

    # roll(-s) then roll(+s) cancels exactly -> identity on norm1's output.
    y1 = x + ln(x, raw["g1"][0], raw["be1"][0])
    ln2 = ln(y1, raw["g2"][0], raw["be2"][0])
    h = jax.nn.gelu(jnp.dot(ln2, raw["w1"], precision=hi) + raw["fb1"][0],
                    approximate=False)
    return y1 + jnp.dot(h, raw["w2"], precision=hi) + raw["fb2"][0]


if __name__ == "__main__":
    # Module config: dim=32, input_resolution=(8, 8), num_heads=4, mlp_ratio=4.0
    B, H, W, C = 2, 8, 8, 32
    mlp_hidden = int(C * 4.0)
    L = H * W

    key = jax.random.PRNGKey(0)
    kx, kp = jax.random.split(key)
    x = jax.random.normal(kx, (B, L, C), jnp.float32)
    raw = init_params(kp, C, mlp_hidden)
    prep = prepare_params(raw)          # one-time packing / casting

    out = bi_transformer_block(x, prep)
    out = jax.block_until_ready(out)

    ref = reference(x, raw)
    assert out.shape == (B, L, C)
    # f32 MXU operands + exact-vs-tanh GELU delta stay well inside this.
    assert jnp.allclose(out, ref, atol=2e-3, rtol=2e-3), "mismatch vs reference"

    print("KERNEL_OK")
</pallas_src>

<mosaic_0001>
module attributes {stable_mosaic.version = 11 : i64} {
  func.func @kernel(%arg0: i32, %arg1: memref<32x128xf32, #tpu.memory_space<vmem>>, %arg2: memref<5x128xf32, #tpu.memory_space<vmem>>, %arg3: memref<1x512xf32, #tpu.memory_space<vmem>>, %arg4: memref<128x512xf32, #tpu.memory_space<vmem>>, %arg5: memref<512x128xf32, #tpu.memory_space<vmem>>, %arg6: memref<128x128xf32, #tpu.memory_space<vmem>>, %arg7: memref<32x128xf32, #tpu.memory_space<vmem>>) attributes {dimension_semantics = [#tpu.dimension_semantics<parallel>], iteration_bounds = array<i64: 1>, scalar_prefetch = 0 : i64, scratch_operands = 0 : i64, tpu.core_type = #tpu.core_type<tc>, window_params = [{transform_indices = @transform_0, window_bounds = array<i64: 32, 128>}, {pipeline_mode = #tpu.pipeline_mode<synchronous>, transform_indices = @transform_1, window_bounds = array<i64: 5, 128>}, {pipeline_mode = #tpu.pipeline_mode<synchronous>, transform_indices = @transform_2, window_bounds = array<i64: 1, 512>}, {pipeline_mode = #tpu.pipeline_mode<synchronous>, transform_indices = @transform_3, window_bounds = array<i64: 128, 512>}, {pipeline_mode = #tpu.pipeline_mode<synchronous>, transform_indices = @transform_4, window_bounds = array<i64: 512, 128>}, {pipeline_mode = #tpu.pipeline_mode<synchronous>, transform_indices = @transform_5, window_bounds = array<i64: 128, 128>}, {transform_indices = @transform_6, window_bounds = array<i64: 32, 128>}]} {
    %c0 = arith.constant 0 : index
    %c0_0 = arith.constant 0 : index
    %0 = vector.load %arg6[%c0, %c0_0] : memref<128x128xf32, #tpu.memory_space<vmem>>, vector<128x128xf32>
    %c0_1 = arith.constant 0 : index
    %c0_2 = arith.constant 0 : index
    %1 = vector.load %arg1[%c0_1, %c0_2] : memref<32x128xf32, #tpu.memory_space<vmem>>, vector<32x128xf32>
    %c0_3 = arith.constant 0 : index
    %c0_4 = arith.constant 0 : index
    %2 = vector.load %arg2[%c0_3, %c0_4] : memref<5x128xf32, #tpu.memory_space<vmem>>, vector<5x128xf32>
    %3 = vector.extract_strided_slice %2 {offsets = [0, 0], sizes = [1, 128], strides = [1, 1]} : vector<5x128xf32> to vector<1x128xf32>
    %4 = vector.extract_strided_slice %2 {offsets = [1, 0], sizes = [1, 128], strides = [1, 1]} : vector<5x128xf32> to vector<1x128xf32>
    %5 = vector.extract_strided_slice %2 {offsets = [2, 0], sizes = [1, 128], strides = [1, 1]} : vector<5x128xf32> to vector<1x128xf32>
    %6 = vector.extract_strided_slice %2 {offsets = [3, 0], sizes = [1, 128], strides = [1, 1]} : vector<5x128xf32> to vector<1x128xf32>
    %7 = vector.extract_strided_slice %2 {offsets = [4, 0], sizes = [1, 128], strides = [1, 1]} : vector<5x128xf32> to vector<1x128xf32>
    %cst = arith.constant dense<0.000000e+00> : vector<32x128xf32>
    %8 = tpu.matmul %1, %0, %cst {dimension_numbers = #tpu.dot_dimension_numbers<[1], [0], [0], [1], [0, 0, 1, 1], [], []>} : vector<32x128xf32>, vector<128x128xf32>, vector<32x128xf32> -> vector<32x128xf32>
    %9 = arith.subf %1, %8 : vector<32x128xf32>
    %10 = arith.mulf %9, %9 : vector<32x128xf32>
    %cst_5 = arith.constant dense<0.000000e+00> : vector<32x128xf32>
    %11 = tpu.matmul %10, %0, %cst_5 {dimension_numbers = #tpu.dot_dimension_numbers<[1], [0], [0], [1], [0, 0, 1, 1], [], []>} : vector<32x128xf32>, vector<128x128xf32>, vector<32x128xf32> -> vector<32x128xf32>
    %cst_6 = arith.constant 9.99999974E-6 : f32
    %12 = vector.broadcast %cst_6 : f32 to vector<32x128xf32>
    %13 = arith.addf %11, %12 : vector<32x128xf32>
    %14 = math.rsqrt %13 : vector<32x128xf32>
    %15 = arith.mulf %9, %14 : vector<32x128xf32>
    %16 = vector.broadcast %3 : vector<1x128xf32> to vector<32x128xf32>
    %17 = arith.mulf %15, %16 : vector<32x128xf32>
    %18 = vector.broadcast %4 : vector<1x128xf32> to vector<32x128xf32>
    %19 = arith.addf %17, %18 : vector<32x128xf32>
    %20 = arith.addf %1, %19 : vector<32x128xf32>
    %cst_7 = arith.constant dense<0.000000e+00> : vector<32x128xf32>
    %21 = tpu.matmul %20, %0, %cst_7 {dimension_numbers = #tpu.dot_dimension_numbers<[1], [0], [0], [1], [0, 0, 1, 1], [], []>} : vector<32x128xf32>, vector<128x128xf32>, vector<32x128xf32> -> vector<32x128xf32>
    %22 = arith.subf %20, %21 : vector<32x128xf32>
    %23 = arith.mulf %22, %22 : vector<32x128xf32>
    %cst_8 = arith.constant dense<0.000000e+00> : vector<32x128xf32>
    %24 = tpu.matmul %23, %0, %cst_8 {dimension_numbers = #tpu.dot_dimension_numbers<[1], [0], [0], [1], [0, 0, 1, 1], [], []>} : vector<32x128xf32>, vector<128x128xf32>, vector<32x128xf32> -> vector<32x128xf32>
    %cst_9 = arith.constant 9.99999974E-6 : f32
    %25 = vector.broadcast %cst_9 : f32 to vector<32x128xf32>
    %26 = arith.addf %24, %25 : vector<32x128xf32>
    %27 = math.rsqrt %26 : vector<32x128xf32>
    %28 = arith.mulf %22, %27 : vector<32x128xf32>
    %29 = vector.broadcast %5 : vector<1x128xf32> to vector<32x128xf32>
    %30 = arith.mulf %28, %29 : vector<32x128xf32>
    %31 = vector.broadcast %6 : vector<1x128xf32> to vector<32x128xf32>
    %32 = arith.addf %30, %31 : vector<32x128xf32>
    %c0_10 = arith.constant 0 : index
    %c0_11 = arith.constant 0 : index
    %33 = vector.load %arg4[%c0_10, %c0_11] : memref<128x512xf32, #tpu.memory_space<vmem>>, vector<128x512xf32>
    %cst_12 = arith.constant dense<0.000000e+00> : vector<32x512xf32>
    %34 = tpu.matmul %32, %33, %cst_12 {dimension_numbers = #tpu.dot_dimension_numbers<[1], [0], [0], [1], [0, 0, 1, 1], [], []>} : vector<32x128xf32>, vector<128x512xf32>, vector<32x512xf32> -> vector<32x512xf32>
    %c0_13 = arith.constant 0 : index
    %c0_14 = arith.constant 0 : index
    %35 = vector.load %arg3[%c0_13, %c0_14] : memref<1x512xf32, #tpu.memory_space<vmem>>, vector<1x512xf32>
    %36 = vector.broadcast %35 : vector<1x512xf32> to vector<32x512xf32>
    %37 = arith.addf %34, %36 : vector<32x512xf32>
    %38 = arith.mulf %37, %37 : vector<32x512xf32>
    %39 = arith.mulf %37, %38 : vector<32x512xf32>
    %cst_15 = arith.constant 4.471500e-02 : f32
    %40 = vector.broadcast %cst_15 : f32 to vector<32x512xf32>
    %41 = arith.mulf %40, %39 : vector<32x512xf32>
    %42 = arith.addf %37, %41 : vector<32x512xf32>
    %cst_16 = arith.constant 0.797884583 : f32
    %43 = vector.broadcast %cst_16 : f32 to vector<32x512xf32>
    %44 = arith.mulf %43, %42 : vector<32x512xf32>
    %45 = math.tanh %44 : vector<32x512xf32>
    %cst_17 = arith.constant 1.000000e+00 : f32
    %46 = vector.broadcast %cst_17 : f32 to vector<32x512xf32>
    %47 = arith.addf %46, %45 : vector<32x512xf32>
    %cst_18 = arith.constant 5.000000e-01 : f32
    %48 = vector.broadcast %cst_18 : f32 to vector<32x512xf32>
    %49 = arith.mulf %48, %47 : vector<32x512xf32>
    %50 = arith.mulf %37, %49 : vector<32x512xf32>
    %c0_19 = arith.constant 0 : index
    %c0_20 = arith.constant 0 : index
    %51 = vector.load %arg5[%c0_19, %c0_20] : memref<512x128xf32, #tpu.memory_space<vmem>>, vector<512x128xf32>
    %cst_21 = arith.constant dense<0.000000e+00> : vector<32x128xf32>
    %52 = tpu.matmul %50, %51, %cst_21 {dimension_numbers = #tpu.dot_dimension_numbers<[1], [0], [0], [1], [0, 0, 1, 1], [], []>} : vector<32x512xf32>, vector<512x128xf32>, vector<32x128xf32> -> vector<32x128xf32>
    %53 = arith.addf %20, %52 : vector<32x128xf32>
    %54 = vector.broadcast %7 : vector<1x128xf32> to vector<32x128xf32>
    %55 = arith.addf %53, %54 : vector<32x128xf32>
    %c0_22 = arith.constant 0 : index
    %c0_23 = arith.constant 0 : index
    %56 = vector.load %arg7[%c0_22, %c0_23] : memref<32x128xf32, #tpu.memory_space<vmem>>, vector<32x128xf32>
    tpu.vector_store %arg7[%c0_22, %c0_23], %55 {strides = array<i32>} : memref<32x128xf32, #tpu.memory_space<vmem>>, vector<32x128xf32>,
    return
  }
  func.func @transform_0(%arg0: i32) -> (i32, i32) {
    %c0_i32 = arith.constant 0 : i32
    %c0_i32_0 = arith.constant 0 : i32
    return %arg0, %c0_i32 : i32, i32
  }
  func.func @transform_1(%arg0: i32) -> (i32, i32) {
    %c0_i32 = arith.constant 0 : i32
    %c0_i32_0 = arith.constant 0 : i32
    %c0_i32_1 = arith.constant 0 : i32
    return %c0_i32, %c0_i32_0 : i32, i32
  }
  func.func @transform_2(%arg0: i32) -> (i32, i32) {
    %c0_i32 = arith.constant 0 : i32
    %c0_i32_0 = arith.constant 0 : i32
    %c0_i32_1 = arith.constant 0 : i32
    return %c0_i32, %c0_i32_0 : i32, i32
  }
  func.func @transform_3(%arg0: i32) -> (i32, i32) {
    %c0_i32 = arith.constant 0 : i32
    %c0_i32_0 = arith.constant 0 : i32
    %c0_i32_1 = arith.constant 0 : i32
    return %c0_i32, %c0_i32_0 : i32, i32
  }
  func.func @transform_4(%arg0: i32) -> (i32, i32) {
    %c0_i32 = arith.constant 0 : i32
    %c0_i32_0 = arith.constant 0 : i32
    %c0_i32_1 = arith.constant 0 : i32
    return %c0_i32, %c0_i32_0 : i32, i32
  }
  func.func @transform_5(%arg0: i32) -> (i32, i32) {
    %c0_i32 = arith.constant 0 : i32
    %c0_i32_0 = arith.constant 0 : i32
    %c0_i32_1 = arith.constant 0 : i32
    return %c0_i32, %c0_i32_0 : i32, i32
  }
  func.func @transform_6(%arg0: i32) -> (i32, i32) {
    %c0_i32 = arith.constant 0 : i32
    %c0_i32_0 = arith.constant 0 : i32
    return %arg0, %c0_i32 : i32, i32
  }
}

</mosaic_0001>

<llo_original>
// kernel: tpu_custom_call.1
$region0: #{tpu_custom_call.1}
  #allocation0 [shape = 'u32[]', space=smem, size = 0x4, offset = 0x4, fixed_abs, tag = 'smem constant byte address 0x4 - core index']
  #allocation1 [shape = 'u32[144,128]{1,0:T(1,128)}', space=vmem, size = 0x12000, scoped, tag = 'internal scratch']
  %s0 = inlined_call_operand.hbm [shape: f32[32,128], index: 0, kind: input, shape index: {}]
  %s1 = inlined_call_operand.hbm [shape: f32[5,128], index: 1, kind: input, shape index: {}]
  %s2 = inlined_call_operand.hbm [shape: f32[1,512], index: 2, kind: input, shape index: {}]
  %s3 = inlined_call_operand.hbm [shape: f32[128,512], index: 3, kind: input, shape index: {}]
  %s4 = inlined_call_operand.hbm [shape: f32[512,128], index: 4, kind: input, shape index: {}]
  %s5 = inlined_call_operand.hbm [shape: f32[128,128], index: 5, kind: input, shape index: {}]
  %s6 = inlined_call_operand.hbm [shape: f32[32,128], index: 6, kind: output, shape index: {}]
  %s7 = sld [smem:[#allocation0]]
  $region58: #{tpu_custom_call.1} parent=0
    _
  %s9 = ssub.s32 1, %s7
  %s10 = scalar_select 0, %s9, %s7
  $region1: #{tpu_custom_call.1} parent=0
    #allocation2 [shape = 'u8[16384]{0}', space=vmem, size = 0x4000, scoped, tag = 'input window, operand 0, single buffered']
    #allocation3 [shape = 's32[1]{0}', space=sflag, size = 0x4, scoped, tag = 'scoped memory for tpu_custom_call.1']
    #allocation4 [shape = 's32[1]{0}', space=sflag, size = 0x4, scoped, tag = 'scoped memory for tpu_custom_call.1']
    #allocation5 [shape = 'u8[4096]{0}', space=vmem, size = 0x1000, scoped, tag = 'input window, operand 1, single buffered']
    #allocation6 [shape = 's32[1]{0}', space=sflag, size = 0x4, scoped, tag = 'scoped memory for tpu_custom_call.1']
    #allocation7 [shape = 'u8[2048]{0}', space=vmem, size = 0x800, scoped, tag = 'input window, operand 2, single buffered']
    #allocation8 [shape = 'u8[262144]{0}', space=vmem, size = 0x40000, scoped, tag = 'input window, operand 3, single buffered']
    #allocation9 [shape = 's32[1]{0}', space=sflag, size = 0x4, scoped, tag = 'scoped memory for tpu_custom_call.1']
    #allocation10 [shape = 'u8[262144]{0}', space=vmem, size = 0x40000, scoped, tag = 'input window, operand 4, single buffered']
    #allocation11 [shape = 'u8[65536]{0}', space=vmem, size = 0x10000, scoped, tag = 'input window, operand 5, single buffered']
    #allocation12 [shape = 's32[1]{0}', space=sflag, size = 0x4, scoped, tag = 'scoped memory for tpu_custom_call.1']
    #allocation13 [shape = 'u8[16384]{0}', space=vmem, size = 0x4000, scoped, tag = 'output window, operand 0, single buffered']
    %11 = vsyncpa [#allocation3], 0
    %12 = vsyncpa [#allocation6], 0
    %13 = vsyncpa [#allocation9], 0
    %14 = vsyncpa [#allocation12], 0
    %15 = vsyncpa [#allocation4], 0
    // Predicated region
    $region2: #{tpu_custom_call.1} parent=1 // pred_check
      _
    $region3: #{tpu_custom_call.1} parent=1 // pred_check_branch
      %17 = sbr.rel (0) target = $region5
    $region4: #{tpu_custom_call.1} parent=1 // pred_region
      %s19 = ssub.s32 512, 512
      %20 = vsyncadd [#allocation3], %s19
      %s21 = sshll.u32 [#allocation2], 4
      %s22 = int_to_ptr.vmem [resolvable:$true] %s21
      %27 = dma.hbm_to_vmem [thread:$0]  %s0, 512, %s22, [#allocation3], 128, 128, 8
    $region5: #{tpu_custom_call.1} parent=1 // pred_fallthru
      _
    // Predicated region
    $region6: #{tpu_custom_call.1} parent=1 // pred_check
      _
    $region7: #{tpu_custom_call.1} parent=1 // pred_check_branch
      %29 = sbr.rel (0) target = $region9
    $region8: #{tpu_custom_call.1} parent=1 // pred_region
      %s31 = ssub.s32 128, 128
      %32 = vsyncadd [#allocation6], %s31
      %s34 = sshll.u32 [#allocation5], 4
      %s35 = int_to_ptr.vmem [resolvable:$true] %s34
      %37 = dma.hbm_to_vmem [thread:$0]  %s1, 128, %s35, [#allocation6]
    $region9: #{tpu_custom_call.1} parent=1 // pred_fallthru
      _
    // Predicated region
    $region10: #{tpu_custom_call.1} parent=1 // pred_check
      _
    $region11: #{tpu_custom_call.1} parent=1 // pred_check_branch
      %39 = sbr.rel (0) target = $region13
    $region12: #{tpu_custom_call.1} parent=1 // pred_region
      %s41 = ssub.s32 64, 64
      %42 = vsyncadd [#allocation6], %s41
      %s44 = sshll.u32 [#allocation7], 4
      %s45 = int_to_ptr.vmem [resolvable:$true] %s44
      %47 = dma.hbm_to_vmem [thread:$0]  %s2, 64, %s45, [#allocation6]
    $region13: #{tpu_custom_call.1} parent=1 // pred_fallthru
      _
    // Predicated region
    $region14: #{tpu_custom_call.1} parent=1 // pred_check
      _
    $region15: #{tpu_custom_call.1} parent=1 // pred_check_branch
      %49 = sbr.rel (0) target = $region17
    $region16: #{tpu_custom_call.1} parent=1 // pred_region
      %s51 = ssub.s32 8192, 8192
      %52 = vsyncadd [#allocation9], %s51
      %s53 = sshll.u32 [#allocation8], 4
      %s54 = int_to_ptr.vmem [resolvable:$true] %s53
      %59 = dma.hbm_to_vmem [thread:$0]  %s3, 8192, %s54, [#allocation9], 512, 512, 32
    $region17: #{tpu_custom_call.1} parent=1 // pred_fallthru
      _
    // Predicated region
    $region18: #{tpu_custom_call.1} parent=1 // pred_check
      _
    $region19: #{tpu_custom_call.1} parent=1 // pred_check_branch
      %61 = sbr.rel (0) target = $region21
    $region20: #{tpu_custom_call.1} parent=1 // pred_region
      %s63 = ssub.s32 8192, 8192
      %64 = vsyncadd [#allocation9], %s63
      %s65 = sshll.u32 [#allocation10], 4
      %s66 = int_to_ptr.vmem [resolvable:$true] %s65
      %71 = dma.hbm_to_vmem [thread:$0]  %s4, 8192, %s66, [#allocation9], 128, 128, 8
    $region21: #{tpu_custom_call.1} parent=1 // pred_fallthru
      _
    // Predicated region
    $region22: #{tpu_custom_call.1} parent=1 // pred_check
      _
    $region23: #{tpu_custom_call.1} parent=1 // pred_check_branch
      %73 = sbr.rel (0) target = $region25
    $region24: #{tpu_custom_call.1} parent=1 // pred_region
      %s75 = ssub.s32 2048, 2048
      %76 = vsyncadd [#allocation12], %s75
      %s77 = sshll.u32 [#allocation11], 4
      %s78 = int_to_ptr.vmem [resolvable:$true] %s77
      %83 = dma.hbm_to_vmem [thread:$0]  %s5, 2048, %s78, [#allocation12], 128, 128, 8
    $region25: #{tpu_custom_call.1} parent=1 // pred_fallthru
      _
    // Predicated region
    $region26: #{tpu_custom_call.1} parent=1 // pred_check
      _
    $region27: #{tpu_custom_call.1} parent=1 // pred_check_branch
      %85 = sbr.rel (0) target = $region29
    $region28: #{tpu_custom_call.1} parent=1 // pred_region
      %86 = dma.done [#allocation3], 512
    $region29: #{tpu_custom_call.1} parent=1 // pred_fallthru
      _
    // Predicated region
    $region30: #{tpu_custom_call.1} parent=1 // pred_check
      _
    $region31: #{tpu_custom_call.1} parent=1 // pred_check_branch
      %88 = sbr.rel (0) target = $region33
    $region32: #{tpu_custom_call.1} parent=1 // pred_region
      %89 = dma.done [#allocation6], 128
    $region33: #{tpu_custom_call.1} parent=1 // pred_fallthru
      _
    // Predicated region
    $region34: #{tpu_custom_call.1} parent=1 // pred_check
      _
    $region35: #{tpu_custom_call.1} parent=1 // pred_check_branch
      %91 = sbr.rel (0) target = $region37
    $region36: #{tpu_custom_call.1} parent=1 // pred_region
      %92 = dma.done [#allocation6], 64
    $region37: #{tpu_custom_call.1} parent=1 // pred_fallthru
      _
    // Predicated region
    $region38: #{tpu_custom_call.1} parent=1 // pred_check
      _
    $region39: #{tpu_custom_call.1} parent=1 // pred_check_branch
      %94 = sbr.rel (0) target = $region41
    $region40: #{tpu_custom_call.1} parent=1 // pred_region
      %95 = dma.done [#allocation9], 8192
    $region41: #{tpu_custom_call.1} parent=1 // pred_fallthru
      _
    // Predicated region
    $region42: #{tpu_custom_call.1} parent=1 // pred_check
      _
    $region43: #{tpu_custom_call.1} parent=1 // pred_check_branch
      %97 = sbr.rel (0) target = $region45
    $region44: #{tpu_custom_call.1} parent=1 // pred_region
      %98 = dma.done [#allocation9], 8192
    $region45: #{tpu_custom_call.1} parent=1 // pred_fallthru
      _
    // Predicated region
    $region46: #{tpu_custom_call.1} parent=1 // pred_check
      _
    $region47: #{tpu_custom_call.1} parent=1 // pred_check_branch
      %100 = sbr.rel (0) target = $region49
    $region48: #{tpu_custom_call.1} parent=1 // pred_region
      %101 = dma.done [#allocation12], 2048
    $region49: #{tpu_custom_call.1} parent=1 // pred_fallthru
      _
    %v102 = vld [vmem:[#allocation11] sm:$0xff]
    %v103 = vld [vmem:[#allocation11 + $0x8] sm:$0xff]
    %v104 = vld [vmem:[#allocation11 + $0x10] sm:$0xff]
    %v105 = vld [vmem:[#allocation11 + $0x18] sm:$0xff]
    %v106 = vld [vmem:[#allocation11 + $0x20] sm:$0xff]
    %v107 = vld [vmem:[#allocation11 + $0x28] sm:$0xff]
    %v108 = vld [vmem:[#allocation11 + $0x30] sm:$0xff]
    %v109 = vld [vmem:[#allocation11 + $0x38] sm:$0xff]
    %v110 = vld [vmem:[#allocation11 + $0x40] sm:$0xff]
    %v111 = vld [vmem:[#allocation11 + $0x48] sm:$0xff]
    %v112 = vld [vmem:[#allocation11 + $0x50] sm:$0xff]
    %v113 = vld [vmem:[#allocation11 + $0x58] sm:$0xff]
    %v114 = vld [vmem:[#allocation11 + $0x60] sm:$0xff]
    %v115 = vld [vmem:[#allocation11 + $0x68] sm:$0xff]
    %v116 = vld [vmem:[#allocation11 + $0x70] sm:$0xff]
    %v117 = vld [vmem:[#allocation11 + $0x78] sm:$0xff]
    %v118 = vld [vmem:[#allocation2] sm:$0xff]
    %v119 = vld [vmem:[#allocation2 + $0x8] sm:$0xff]
    %v120 = vld [vmem:[#allocation2 + $0x10] sm:$0xff]
    %v121 = vld [vmem:[#allocation2 + $0x18] sm:$0xff]
    %v122 = vld [vmem:[#allocation5] sm:$0x1f]
    %123 = vmatprep.subr.mxu0 0.0
    %124 = vmatpush1.msra.mxu0 %v102
    %125 = vmatprep.subr.mxu0 0.0
    %126 = vmatpush1.msra.mxu0 %v103
    %127 = vmatprep.subr.mxu0 0.0
    %128 = vmatpush1.msra.mxu0 %v104
    %129 = vmatprep.subr.mxu0 0.0
    %130 = vmatpush1.msra.mxu0 %v105
    %131 = vmatprep.subr.mxu0 0.0
    %132 = vmatpush1.msra.mxu0 %v106
    %133 = vmatprep.subr.mxu0 0.0
    %134 = vmatpush1.msra.mxu0 %v107
    %135 = vmatprep.subr.mxu0 0.0
    %136 = vmatpush1.msra.mxu0 %v108
    %137 = vmatprep.subr.mxu0 0.0
    %138 = vmatpush1.msra.mxu0 %v109
    %139 = vmatprep.subr.mxu0 0.0
    %140 = vmatpush1.msra.mxu0 %v110
    %141 = vmatprep.subr.mxu0 0.0
    %142 = vmatpush1.msra.mxu0 %v111
    %143 = vmatprep.subr.mxu0 0.0
    %144 = vmatpush1.msra.mxu0 %v112
    %145 = vmatprep.subr.mxu0 0.0
    %146 = vmatpush1.msra.mxu0 %v113
    %147 = vmatprep.subr.mxu0 0.0
    %148 = vmatpush1.msra.mxu0 %v114
    %149 = vmatprep.subr.mxu0 0.0
    %150 = vmatpush1.msra.mxu0 %v115
    %151 = vmatprep.subr.mxu0 0.0
    %152 = vmatpush1.msra.mxu0 %v116
    %153 = vmatprep.subr.mxu0 0.0
    %154 = vmatpush1.msra.mxu0 %v117
    %155 = vmatprep.subr.mxu0 0.0
    %156 = vmatpush1.msra.mxu0 0.0
    %157 = vmatprep.subr.mxu0 0.0
    %158 = vmatpush1.msra.mxu0 0.0
    %159 = vmatprep.subr.mxu0 0.0
    %160 = vmatpush1.msra.mxu0 0.0
    %161 = vmatprep.subr.mxu0 0.0
    %162 = vmatpush1.msra.mxu0 0.0
    %163 = vmatprep.subr.mxu0 0.0
    %164 = vmatpush1.msra.mxu0 0.0
    %165 = vmatprep.subr.mxu0 0.0
    %166 = vmatpush1.msra.mxu0 0.0
    %167 = vmatprep.subr.mxu0 0.0
    %168 = vmatpush1.msra.mxu0 0.0
    %169 = vmatprep.subr.mxu0 0.0
    %170 = vmatpush1.msra.mxu0 0.0
    %171 = vmatprep.subr.mxu0 0.0
    %172 = vmatpush1.msra.mxu0 0.0
    %173 = vmatprep.subr.mxu0 0.0
    %174 = vmatpush1.msra.mxu0 0.0
    %175 = vmatprep.subr.mxu0 0.0
    %176 = vmatpush1.msra.mxu0 0.0
    %177 = vmatprep.subr.mxu0 0.0
    %178 = vmatpush1.msra.mxu0 0.0
    %179 = vmatprep.subr.mxu0 0.0
    %180 = vmatpush1.msra.mxu0 0.0
    %181 = vmatprep.subr.mxu0 0.0
    %182 = vmatpush1.msra.mxu0 0.0
    %183 = vmatprep.subr.mxu0 0.0
    %184 = vmatpush1.msra.mxu0 0.0
    %185 = vmatprep.subr.mxu0 0.0
    %186 = vmatpush1.msra.mxu0 0.0
    %187 = vmatprep.mubr.f32.mxu0 0.0
    %188 = vmatmul.mubr.f32.gmra.mrb[0].mxu0 %v118
    %v189 = vpop.f32.mrb[0].mxu0
    %v190 = vadd.f32 0.0, %v189
    %v191 = vpop.f32.mrb[0].mxu0
    %192 = vmatprep.mubr.f32.mxu0 0.0
    %193 = vmatmul.mubr.f32.gmra.mrb[0].mxu0 %v119
    %v194 = vpop.f32.mrb[0].mxu0
    %v195 = vadd.f32 0.0, %v194
    %v196 = vpop.f32.mrb[0].mxu0
    %197 = vmatprep.mubr.f32.mxu0 0.0
    %198 = vmatmul.mubr.f32.gmra.mrb[0].mxu0 %v120
    %v199 = vpop.f32.mrb[0].mxu0
    %v200 = vadd.f32 0.0, %v199
    %v201 = vpop.f32.mrb[0].mxu0
    %202 = vmatprep.mubr.f32.mxu0 0.0
    %203 = vmatmul.mubr.f32.gmra.mrb[0].mxu0 %v121
    %v204 = vpop.f32.mrb[0].mxu0
    %v205 = vadd.f32 0.0, %v204
    %v206 = vpop.f32.mrb[0].mxu0
    %207 = vdwg.mxu0
    %v208 = vsub.f32 %v118, %v190
    %v209 = vsub.f32 %v119, %v195
    %v210 = vsub.f32 %v120, %v200
    %v211 = vsub.f32 %v121, %v205
    %v212 = vmul.f32 %v208, %v208
    %v213 = vmul.f32 %v209, %v209
    %v214 = vmul.f32 %v210, %v210
    %v215 = vmul.f32 %v211, %v211
    %216 = vmatprep.subr.mxu0 0.0
    %217 = vmatpush1.msra.mxu0 %v102
    %218 = vmatprep.subr.mxu0 0.0
    %219 = vmatpush1.msra.mxu0 %v103
    %220 = vmatprep.subr.mxu0 0.0
    %221 = vmatpush1.msra.mxu0 %v104
    %222 = vmatprep.subr.mxu0 0.0
    %223 = vmatpush1.msra.mxu0 %v105
    %224 = vmatprep.subr.mxu0 0.0
    %225 = vmatpush1.msra.mxu0 %v106
    %226 = vmatprep.subr.mxu0 0.0
    %227 = vmatpush1.msra.mxu0 %v107
    %228 = vmatprep.subr.mxu0 0.0
    %229 = vmatpush1.msra.mxu0 %v108
    %230 = vmatprep.subr.mxu0 0.0
    %231 = vmatpush1.msra.mxu0 %v109
    %232 = vmatprep.subr.mxu0 0.0
    %233 = vmatpush1.msra.mxu0 %v110
    %234 = vmatprep.subr.mxu0 0.0
    %235 = vmatpush1.msra.mxu0 %v111
    %236 = vmatprep.subr.mxu0 0.0
    %237 = vmatpush1.msra.mxu0 %v112
    %238 = vmatprep.subr.mxu0 0.0
    %239 = vmatpush1.msra.mxu0 %v113
    %240 = vmatprep.subr.mxu0 0.0
    %241 = vmatpush1.msra.mxu0 %v114
    %242 = vmatprep.subr.mxu0 0.0
    %243 = vmatpush1.msra.mxu0 %v115
    %244 = vmatprep.subr.mxu0 0.0
    %245 = vmatpush1.msra.mxu0 %v116
    %246 = vmatprep.subr.mxu0 0.0
    %247 = vmatpush1.msra.mxu0 %v117
    %248 = vmatprep.subr.mxu0 0.0
    %249 = vmatpush1.msra.mxu0 0.0
    %250 = vmatprep.subr.mxu0 0.0
    %251 = vmatpush1.msra.mxu0 0.0
    %252 = vmatprep.subr.mxu0 0.0
    %253 = vmatpush1.msra.mxu0 0.0
    %254 = vmatprep.subr.mxu0 0.0
    %255 = vmatpush1.msra.mxu0 0.0
    %256 = vmatprep.subr.mxu0 0.0
    %257 = vmatpush1.msra.mxu0 0.0
    %258 = vmatprep.subr.mxu0 0.0
    %259 = vmatpush1.msra.mxu0 0.0
    %260 = vmatprep.subr.mxu0 0.0
    %261 = vmatpush1.msra.mxu0 0.0
    %262 = vmatprep.subr.mxu0 0.0
    %263 = vmatpush1.msra.mxu0 0.0
    %264 = vmatprep.subr.mxu0 0.0
    %265 = vmatpush1.msra.mxu0 0.0
    %266 = vmatprep.subr.mxu0 0.0
    %267 = vmatpush1.msra.mxu0 0.0
    %268 = vmatprep.subr.mxu0 0.0
    %269 = vmatpush1.msra.mxu0 0.0
    %270 = vmatprep.subr.mxu0 0.0
    %271 = vmatpush1.msra.mxu0 0.0
    %272 = vmatprep.subr.mxu0 0.0
    %273 = vmatpush1.msra.mxu0 0.0
    %274 = vmatprep.subr.mxu0 0.0
    %275 = vmatpush1.msra.mxu0 0.0
    %276 = vmatprep.subr.mxu0 0.0
    %277 = vmatpush1.msra.mxu0 0.0
    %278 = vmatprep.subr.mxu0 0.0
    %279 = vmatpush1.msra.mxu0 0.0
    %280 = vmatprep.mubr.f32.mxu0 0.0
    %281 = vmatmul.mubr.f32.gmra.mrb[0].mxu0 %v212
    %v282 = vpop.f32.mrb[0].mxu0
    %v283 = vadd.f32 1e-05, %v282
    %v284 = vpop.f32.mrb[0].mxu0
    %285 = vmatprep.mubr.f32.mxu0 0.0
    %286 = vmatmul.mubr.f32.gmra.mrb[0].mxu0 %v213
    %v287 = vpop.f32.mrb[0].mxu0
    %v288 = vadd.f32 1e-05, %v287
    %v289 = vpop.f32.mrb[0].mxu0
    %290 = vmatprep.mubr.f32.mxu0 0.0
    %291 = vmatmul.mubr.f32.gmra.mrb[0].mxu0 %v214
    %v292 = vpop.f32.mrb[0].mxu0
    %v293 = vadd.f32 1e-05, %v292
    %v294 = vpop.f32.mrb[0].mxu0
    %295 = vmatprep.mubr.f32.mxu0 0.0
    %296 = vmatmul.mubr.f32.gmra.mrb[0].mxu0 %v215
    %v297 = vpop.f32.mrb[0].mxu0
    %v298 = vadd.f32 1e-05, %v297
    %v299 = vpop.f32.mrb[0].mxu0
    %300 = vdwg.mxu0
    %v301 = vrsqrt.pop %v283
    %v302 = vrsqrt.pop %v288
    %v303 = vrsqrt.pop %v293
    %v304 = vrsqrt.pop %v298
    %v305 = vmul.f32 %v208, %v301
    %v306 = vmul.f32 %v209, %v302
    %v307 = vmul.f32 %v210, %v303
    %v308 = vmul.f32 %v211, %v304
    %v309 = vlaneseq
    %v310 = vshrl.u32 %v309, 7
    %v311 = vsub.s32 0, %v310
    %v312 = vrot.slane %v122, %v311
    %v313 = vmul.f32 %v305, %v312
    %v314 = vmul.f32 %v306, %v312
    %v315 = vmul.f32 %v307, %v312
    %v316 = vmul.f32 %v308, %v312
    %v317 = vlaneseq
    %v318 = vshrl.u32 %v317, 7
    %v319 = vsub.s32 1, %v318
    %v320 = vrot.slane %v122, %v319
    %v321 = vadd.f32 %v313, %v320
    %v322 = vadd.f32 %v314, %v320
    %v323 = vadd.f32 %v315, %v320
    %v324 = vadd.f32 %v316, %v320
    %v325 = vadd.f32 %v118, %v321
    %v326 = vadd.f32 %v119, %v322
    %v327 = vadd.f32 %v120, %v323
    %v328 = vadd.f32 %v121, %v324
    %329 = vmatprep.subr.mxu0 0.0
    %330 = vmatpush1.msra.mxu0 %v102
    %331 = vmatprep.subr.mxu0 0.0
    %332 = vmatpush1.msra.mxu0 %v103
    %333 = vmatprep.subr.mxu0 0.0
    %334 = vmatpush1.msra.mxu0 %v104
    %335 = vmatprep.subr.mxu0 0.0
    %336 = vmatpush1.msra.mxu0 %v105
    %337 = vmatprep.subr.mxu0 0.0
    %338 = vmatpush1.msra.mxu0 %v106
    %339 = vmatprep.subr.mxu0 0.0
    %340 = vmatpush1.msra.mxu0 %v107
    %341 = vmatprep.subr.mxu0 0.0
    %342 = vmatpush1.msra.mxu0 %v108
    %343 = vmatprep.subr.mxu0 0.0
    %344 = vmatpush1.msra.mxu0 %v109
    %345 = vmatprep.subr.mxu0 0.0
    %346 = vmatpush1.msra.mxu0 %v110
    %347 = vmatprep.subr.mxu0 0.0
    %348 = vmatpush1.msra.mxu0 %v111
    %349 = vmatprep.subr.mxu0 0.0
    %350 = vmatpush1.msra.mxu0 %v112
    %351 = vmatprep.subr.mxu0 0.0
    %352 = vmatpush1.msra.mxu0 %v113
    %353 = vmatprep.subr.mxu0 0.0
    %354 = vmatpush1.msra.mxu0 %v114
    %355 = vmatprep.subr.mxu0 0.0
    %356 = vmatpush1.msra.mxu0 %v115
    %357 = vmatprep.subr.mxu0 0.0
    %358 = vmatpush1.msra.mxu0 %v116
    %359 = vmatprep.subr.mxu0 0.0
    %360 = vmatpush1.msra.mxu0 %v117
    %361 = vmatprep.subr.mxu0 0.0
    %362 = vmatpush1.msra.mxu0 0.0
    %363 = vmatprep.subr.mxu0 0.0
    %364 = vmatpush1.msra.mxu0 0.0
    %365 = vmatprep.subr.mxu0 0.0
    %366 = vmatpush1.msra.mxu0 0.0
    %367 = vmatprep.subr.mxu0 0.0
    %368 = vmatpush1.msra.mxu0 0.0
    %369 = vmatprep.subr.mxu0 0.0
    %370 = vmatpush1.msra.mxu0 0.0
    %371 = vmatprep.subr.mxu0 0.0
    %372 = vmatpush1.msra.mxu0 0.0
    %373 = vmatprep.subr.mxu0 0.0
    %374 = vmatpush1.msra.mxu0 0.0
    %375 = vmatprep.subr.mxu0 0.0
    %376 = vmatpush1.msra.mxu0 0.0
    %377 = vmatprep.subr.mxu0 0.0
    %378 = vmatpush1.msra.mxu0 0.0
    %379 = vmatprep.subr.mxu0 0.0
    %380 = vmatpush1.msra.mxu0 0.0
    %381 = vmatprep.subr.mxu0 0.0
    %382 = vmatpush1.msra.mxu0 0.0
    %383 = vmatprep.subr.mxu0 0.0
    %384 = vmatpush1.msra.mxu0 0.0
    %385 = vmatprep.subr.mxu0 0.0
    %386 = vmatpush1.msra.mxu0 0.0
    %387 = vmatprep.subr.mxu0 0.0
    %388 = vmatpush1.msra.mxu0 0.0
    %389 = vmatprep.subr.mxu0 0.0
    %390 = vmatpush1.msra.mxu0 0.0
    %391 = vmatprep.subr.mxu0 0.0
    %392 = vmatpush1.msra.mxu0 0.0
    %393 = vmatprep.mubr.f32.mxu0 0.0
    %394 = vmatmul.mubr.f32.gmra.mrb[0].mxu0 %v325
    %v395 = vpop.f32.mrb[0].mxu0
    %v396 = vadd.f32 0.0, %v395
    %v397 = vpop.f32.mrb[0].mxu0
    %398 = vmatprep.mubr.f32.mxu0 0.0
    %399 = vmatmul.mubr.f32.gmra.mrb[0].mxu0 %v326
    %v400 = vpop.f32.mrb[0].mxu0
    %v401 = vadd.f32 0.0, %v400
    %v402 = vpop.f32.mrb[0].mxu0
    %403 = vmatprep.mubr.f32.mxu0 0.0
    %404 = vmatmul.mubr.f32.gmra.mrb[0].mxu0 %v327
    %v405 = vpop.f32.mrb[0].mxu0
    %v406 = vadd.f32 0.0, %v405
    %v407 = vpop.f32.mrb[0].mxu0
    %408 = vmatprep.mubr.f32.mxu0 0.0
    %409 = vmatmul.mubr.f32.gmra.mrb[0].mxu0 %v328
    %v410 = vpop.f32.mrb[0].mxu0
    %v411 = vadd.f32 0.0, %v410
    %v412 = vpop.f32.mrb[0].mxu0
    %413 = vdwg.mxu0
    %v414 = vsub.f32 %v325, %v396
    %v415 = vsub.f32 %v326, %v401
    %v416 = vsub.f32 %v327, %v406
    %v417 = vsub.f32 %v328, %v411
    %v418 = vmul.f32 %v414, %v414
    %v419 = vmul.f32 %v415, %v415
    %v420 = vmul.f32 %v416, %v416
    %v421 = vmul.f32 %v417, %v417
    %422 = vmatprep.subr.mxu0 0.0
    %423 = vmatpush1.msra.mxu0 %v102
    %424 = vmatprep.subr.mxu0 0.0
    %425 = vmatpush1.msra.mxu0 %v103
    %426 = vmatprep.subr.mxu0 0.0
    %427 = vmatpush1.msra.mxu0 %v104
    %428 = vmatprep.subr.mxu0 0.0
    %429 = vmatpush1.msra.mxu0 %v105
    %430 = vmatprep.subr.mxu0 0.0
    %431 = vmatpush1.msra.mxu0 %v106
    %432 = vmatprep.subr.mxu0 0.0
    %433 = vmatpush1.msra.mxu0 %v107
    %434 = vmatprep.subr.mxu0 0.0
    %435 = vmatpush1.msra.mxu0 %v108
    %436 = vmatprep.subr.mxu0 0.0
    %437 = vmatpush1.msra.mxu0 %v109
    %438 = vmatprep.subr.mxu0 0.0
    %439 = vmatpush1.msra.mxu0 %v110
    %440 = vmatprep.subr.mxu0 0.0
    %441 = vmatpush1.msra.mxu0 %v111
    %442 = vmatprep.subr.mxu0 0.0
    %443 = vmatpush1.msra.mxu0 %v112
    %444 = vmatprep.subr.mxu0 0.0
    %445 = vmatpush1.msra.mxu0 %v113
    %446 = vmatprep.subr.mxu0 0.0
    %447 = vmatpush1.msra.mxu0 %v114
    %448 = vmatprep.subr.mxu0 0.0
    %449 = vmatpush1.msra.mxu0 %v115
    %450 = vmatprep.subr.mxu0 0.0
    %451 = vmatpush1.msra.mxu0 %v116
    %452 = vmatprep.subr.mxu0 0.0
    %453 = vmatpush1.msra.mxu0 %v117
    %454 = vmatprep.subr.mxu0 0.0
    %455 = vmatpush1.msra.mxu0 0.0
    %456 = vmatprep.subr.mxu0 0.0
    %457 = vmatpush1.msra.mxu0 0.0
    %458 = vmatprep.subr.mxu0 0.0
    %459 = vmatpush1.msra.mxu0 0.0
    %460 = vmatprep.subr.mxu0 0.0
    %461 = vmatpush1.msra.mxu0 0.0
    %462 = vmatprep.subr.mxu0 0.0
    %463 = vmatpush1.msra.mxu0 0.0
    %464 = vmatprep.subr.mxu0 0.0
    %465 = vmatpush1.msra.mxu0 0.0
    %466 = vmatprep.subr.mxu0 0.0
    %467 = vmatpush1.msra.mxu0 0.0
    %468 = vmatprep.subr.mxu0 0.0
    %469 = vmatpush1.msra.mxu0 0.0
    %470 = vmatprep.subr.mxu0 0.0
    %471 = vmatpush1.msra.mxu0 0.0
    %472 = vmatprep.subr.mxu0 0.0
    %473 = vmatpush1.msra.mxu0 0.0
    %474 = vmatprep.subr.mxu0 0.0
    %475 = vmatpush1.msra.mxu0 0.0
    %476 = vmatprep.subr.mxu0 0.0
    %477 = vmatpush1.msra.mxu0 0.0
    %478 = vmatprep.subr.mxu0 0.0
    %479 = vmatpush1.msra.mxu0 0.0
    %480 = vmatprep.subr.mxu0 0.0
    %481 = vmatpush1.msra.mxu0 0.0
    %482 = vmatprep.subr.mxu0 0.0
    %483 = vmatpush1.msra.mxu0 0.0
    %484 = vmatprep.subr.mxu0 0.0
    %485 = vmatpush1.msra.mxu0 0.0
    %486 = vmatprep.mubr.f32.mxu0 0.0
    %487 = vmatmul.mubr.f32.gmra.mrb[0].mxu0 %v418
    %v488 = vpop.f32.mrb[0].mxu0
    %v489 = vadd.f32 1e-05, %v488
    %v490 = vpop.f32.mrb[0].mxu0
    %491 = vmatprep.mubr.f32.mxu0 0.0
    %492 = vmatmul.mubr.f32.gmra.mrb[0].mxu0 %v419
    %v493 = vpop.f32.mrb[0].mxu0
    %v494 = vadd.f32 1e-05, %v493
    %v495 = vpop.f32.mrb[0].mxu0
    %496 = vmatprep.mubr.f32.mxu0 0.0
    %497 = vmatmul.mubr.f32.gmra.mrb[0].mxu0 %v420
    %v498 = vpop.f32.mrb[0].mxu0
    %v499 = vadd.f32 1e-05, %v498
    %v500 = vpop.f32.mrb[0].mxu0
    %501 = vmatprep.mubr.f32.mxu0 0.0
    %502 = vmatmul.mubr.f32.gmra.mrb[0].mxu0 %v421
    %v503 = vpop.f32.mrb[0].mxu0
    %v504 = vadd.f32 1e-05, %v503
    %v505 = vpop.f32.mrb[0].mxu0
    %506 = vdwg.mxu0
    %v507 = vrsqrt.pop %v489
    %v508 = vrsqrt.pop %v494
    %v509 = vrsqrt.pop %v499
    %v510 = vrsqrt.pop %v504
    %v511 = vmul.f32 %v414, %v507
    %v512 = vmul.f32 %v415, %v508
    %v513 = vmul.f32 %v416, %v509
    %v514 = vmul.f32 %v417, %v510
    %v515 = vlaneseq
    %v516 = vshrl.u32 %v515, 7
    %v517 = vsub.s32 2, %v516
    %v518 = vrot.slane %v122, %v517
    %v519 = vmul.f32 %v511, %v518
    %v520 = vmul.f32 %v512, %v518
    %v521 = vmul.f32 %v513, %v518
    %v522 = vmul.f32 %v514, %v518
    %v523 = vlaneseq
    %v524 = vshrl.u32 %v523, 7
    %v525 = vsub.s32 3, %v524
    %v526 = vrot.slane %v122, %v525
    %v527 = vadd.f32 %v519, %v526
    %v528 = vadd.f32 %v520, %v526
    %v529 = vadd.f32 %v521, %v526
    %v530 = vadd.f32 %v522, %v526
    %v531 = vld [vmem:[#allocation8] sm:$0xff]
    %v532 = vld [vmem:[#allocation8 + $0x8] sm:$0xff]
    %v533 = vld [vmem:[#allocation8 + $0x10] sm:$0xff]
    %v534 = vld [vmem:[#allocation8 + $0x18] sm:$0xff]
    %v535 = vld [vmem:[#allocation8 + $0x20] sm:$0xff]
    %v536 = vld [vmem:[#allocation8 + $0x28] sm:$0xff]
    %v537 = vld [vmem:[#allocation8 + $0x30] sm:$0xff]
    %v538 = vld [vmem:[#allocation8 + $0x38] sm:$0xff]
    %v539 = vld [vmem:[#allocation8 + $0x40] sm:$0xff]
    %v540 = vld [vmem:[#allocation8 + $0x48] sm:$0xff]
    %v541 = vld [vmem:[#allocation8 + $0x50] sm:$0xff]
    %v542 = vld [vmem:[#allocation8 + $0x58] sm:$0xff]
    %v543 = vld [vmem:[#allocation8 + $0x60] sm:$0xff]
    %v544 = vld [vmem:[#allocation8 + $0x68] sm:$0xff]
    %v545 = vld [vmem:[#allocation8 + $0x70] sm:$0xff]
    %v546 = vld [vmem:[#allocation8 + $0x78] sm:$0xff]
    %v547 = vld [vmem:[#allocation8 + $0x80] sm:$0xff]
    %v548 = vld [vmem:[#allocation8 + $0x88] sm:$0xff]
    %v549 = vld [vmem:[#allocation8 + $0x90] sm:$0xff]
    %v550 = vld [vmem:[#allocation8 + $0x98] sm:$0xff]
    %v551 = vld [vmem:[#allocation8 + $0xa0] sm:$0xff]
    %v552 = vld [vmem:[#allocation8 + $0xa8] sm:$0xff]
    %v553 = vld [vmem:[#allocation8 + $0xb0] sm:$0xff]
    %v554 = vld [vmem:[#allocation8 + $0xb8] sm:$0xff]
    %v555 = vld [vmem:[#allocation8 + $0xc0] sm:$0xff]
    %v556 = vld [vmem:[#allocation8 + $0xc8] sm:$0xff]
    %v557 = vld [vmem:[#allocation8 + $0xd0] sm:$0xff]
    %v558 = vld [vmem:[#allocation8 + $0xd8] sm:$0xff]
    %v559 = vld [vmem:[#allocation8 + $0xe0] sm:$0xff]
    %v560 = vld [vmem:[#allocation8 + $0xe8] sm:$0xff]
    %v561 = vld [vmem:[#allocation8 + $0xf0] sm:$0xff]
    %v562 = vld [vmem:[#allocation8 + $0xf8] sm:$0xff]
    %v563 = vld [vmem:[#allocation8 + $0x100] sm:$0xff]
    %v564 = vld [vmem:[#allocation8 + $0x108] sm:$0xff]
    %v565 = vld [vmem:[#allocation8 + $0x110] sm:$0xff]
    %v566 = vld [vmem:[#allocation8 + $0x118] sm:$0xff]
    %v567 = vld [vmem:[#allocation8 + $0x120] sm:$0xff]
    %v568 = vld [vmem:[#allocation8 + $0x128] sm:$0xff]
    %v569 = vld [vmem:[#allocation8 + $0x130] sm:$0xff]
    %v570 = vld [vmem:[#allocation8 + $0x138] sm:$0xff]
    %v571 = vld [vmem:[#allocation8 + $0x140] sm:$0xff]
    %v572 = vld [vmem:[#allocation8 + $0x148] sm:$0xff]
    %v573 = vld [vmem:[#allocation8 + $0x150] sm:$0xff]
    %v574 = vld [vmem:[#allocation8 + $0x158] sm:$0xff]
    %v575 = vld [vmem:[#allocation8 + $0x160] sm:$0xff]
    %v576 = vld [vmem:[#allocation8 + $0x168] sm:$0xff]
    %v577 = vld [vmem:[#allocation8 + $0x170] sm:$0xff]
    %v578 = vld [vmem:[#allocation8 + $0x178] sm:$0xff]
    %v579 = vld [vmem:[#allocation8 + $0x180] sm:$0xff]
    %v580 = vld [vmem:[#allocation8 + $0x188] sm:$0xff]
    %v581 = vld [vmem:[#allocation8 + $0x190] sm:$0xff]
    %v582 = vld [vmem:[#allocation8 + $0x198] sm:$0xff]
    %v583 = vld [vmem:[#allocation8 + $0x1a0] sm:$0xff]
    %v584 = vld [vmem:[#allocation8 + $0x1a8] sm:$0xff]
    %v585 = vld [vmem:[#allocation8 + $0x1b0] sm:$0xff]
    %v586 = vld [vmem:[#allocation8 + $0x1b8] sm:$0xff]
    %v587 = vld [vmem:[#allocation8 + $0x1c0] sm:$0xff]
    %v588 = vld [vmem:[#allocation8 + $0x1c8] sm:$0xff]
    %v589 = vld [vmem:[#allocation8 + $0x1d0] sm:$0xff]
    %v590 = vld [vmem:[#allocation8 + $0x1d8] sm:$0xff]
    %v591 = vld [vmem:[#allocation8 + $0x1e0] sm:$0xff]
    %v592 = vld [vmem:[#allocation8 + $0x1e8] sm:$0xff]
    %v593 = vld [vmem:[#allocation8 + $0x1f0] sm:$0xff]
    %v594 = vld [vmem:[#allocation8 + $0x1f8] sm:$0xff]
    %v595 = vld [vmem:[#allocation7] sm:$0xf]
    %v597 = vlaneseq
    %v598 = vshrl.u32 %v597, 7
    %v599 = vsub.s32 0, %v598
    %v600 = vrot.slane %v595, %v599
    %v601 = vlaneseq
    %v602 = vshrl.u32 %v601, 7
    %v603 = vsub.s32 1, %v602
    %v604 = vrot.slane %v595, %v603
    %v605 = vlaneseq
    %v606 = vshrl.u32 %v605, 7
    %v607 = vsub.s32 2, %v606
    %v608 = vrot.slane %v595, %v607
    %v609 = vlaneseq
    %v610 = vshrl.u32 %v609, 7
    %v611 = vsub.s32 3, %v610
    %v612 = vrot.slane %v595, %v611
    %617 = vmatprep.subr.mxu0 %v532
    %618 = vmatpush1.msra.mxu0 %v531
    %619 = vmatprep.subr.mxu0 %v536
    %620 = vmatpush1.msra.mxu0 %v535
    %621 = vmatprep.subr.mxu0 %v540
    %622 = vmatpush1.msra.mxu0 %v539
    %623 = vmatprep.subr.mxu0 %v544
    %624 = vmatpush1.msra.mxu0 %v543
    %625 = vmatprep.subr.mxu0 %v548
    %626 = vmatpush1.msra.mxu0 %v547
    %627 = vmatprep.subr.mxu0 %v552
    %628 = vmatpush1.msra.mxu0 %v551
    %629 = vmatprep.subr.mxu0 %v556
    %630 = vmatpush1.msra.mxu0 %v555
    %631 = vmatprep.subr.mxu0 %v560
    %632 = vmatpush1.msra.mxu0 %v559
    %633 = vmatprep.subr.mxu0 %v564
    %634 = vmatpush1.msra.mxu0 %v563
    %635 = vmatprep.subr.mxu0 %v568
    %636 = vmatpush1.msra.mxu0 %v567
    %637 = vmatprep.subr.mxu0 %v572
    %638 = vmatpush1.msra.mxu0 %v571
    %639 = vmatprep.subr.mxu0 %v576
    %640 = vmatpush1.msra.mxu0 %v575
    %641 = vmatprep.subr.mxu0 %v580
    %642 = vmatpush1.msra.mxu0 %v579
    %643 = vmatprep.subr.mxu0 %v584
    %644 = vmatpush1.msra.mxu0 %v583
    %645 = vmatprep.subr.mxu0 %v588
    %646 = vmatpush1.msra.mxu0 %v587
    %647 = vmatprep.subr.mxu0 %v592
    %648 = vmatpush1.msra.mxu0 %v591
    %649 = vmatprep.subr.mxu0 0.0
    %650 = vmatpush1.msra.mxu0 0.0
    %651 = vmatprep.subr.mxu0 0.0
    %652 = vmatpush1.msra.mxu0 0.0
    %653 = vmatprep.subr.mxu0 0.0
    %654 = vmatpush1.msra.mxu0 0.0
    %655 = vmatprep.subr.mxu0 0.0
    %656 = vmatpush1.msra.mxu0 0.0
    %657 = vmatprep.subr.mxu0 0.0
    %658 = vmatpush1.msra.mxu0 0.0
    %659 = vmatprep.subr.mxu0 0.0
    %660 = vmatpush1.msra.mxu0 0.0
    %661 = vmatprep.subr.mxu0 0.0
    %662 = vmatpush1.msra.mxu0 0.0
    %663 = vmatprep.subr.mxu0 0.0
    %664 = vmatpush1.msra.mxu0 0.0
    %665 = vmatprep.subr.mxu0 0.0
    %666 = vmatpush1.msra.mxu0 0.0
    %667 = vmatprep.subr.mxu0 0.0
    %668 = vmatpush1.msra.mxu0 0.0
    %669 = vmatprep.subr.mxu0 0.0
    %670 = vmatpush1.msra.mxu0 0.0
    %671 = vmatprep.subr.mxu0 0.0
    %672 = vmatpush1.msra.mxu0 0.0
    %673 = vmatprep.subr.mxu0 0.0
    %674 = vmatpush1.msra.mxu0 0.0
    %675 = vmatprep.subr.mxu0 0.0
    %676 = vmatpush1.msra.mxu0 0.0
    %677 = vmatprep.subr.mxu0 0.0
    %678 = vmatpush1.msra.mxu0 0.0
    %679 = vmatprep.subr.mxu0 0.0
    %680 = vmatpush1.msra.mxu0 0.0
    %681 = vmatprep.mubr.f32.mxu0 0.0
    %682 = vmatmul.mubr.f32.gmra.mrb[0].mxu0 %v527
    %v683 = vpop.f32.mrb[0].mxu0
    %v684 = vadd.f32 %v600, %v683
    %v685 = vpop.f32.mrb[0].mxu0
    %v686 = vadd.f32 %v604, %v685
    %687 = vmatprep.mubr.f32.mxu0 0.0
    %688 = vmatmul.mubr.f32.gmra.mrb[0].mxu0 %v528
    %v689 = vpop.f32.mrb[0].mxu0
    %v690 = vadd.f32 %v600, %v689
    %v691 = vpop.f32.mrb[0].mxu0
    %v692 = vadd.f32 %v604, %v691
    %693 = vmatprep.mubr.f32.mxu0 0.0
    %694 = vmatmul.mubr.f32.gmra.mrb[0].mxu0 %v529
    %v695 = vpop.f32.mrb[0].mxu0
    %v696 = vadd.f32 %v600, %v695
    %v697 = vpop.f32.mrb[0].mxu0
    %v698 = vadd.f32 %v604, %v697
    %699 = vmatprep.mubr.f32.mxu0 0.0
    %700 = vmatmul.mubr.f32.gmra.mrb[0].mxu0 %v530
    %v701 = vpop.f32.mrb[0].mxu0
    %v702 = vadd.f32 %v600, %v701
    %v703 = vpop.f32.mrb[0].mxu0
    %v704 = vadd.f32 %v604, %v703
    %705 = vdwg.mxu0
    %706 = vmatprep.subr.mxu0 %v534
    %707 = vmatpush1.msra.mxu0 %v533
    %708 = vmatprep.subr.mxu0 %v538
    %709 = vmatpush1.msra.mxu0 %v537
    %710 = vmatprep.subr.mxu0 %v542
    %711 = vmatpush1.msra.mxu0 %v541
    %712 = vmatprep.subr.mxu0 %v546
    %713 = vmatpush1.msra.mxu0 %v545
    %714 = vmatprep.subr.mxu0 %v550
    %715 = vmatpush1.msra.mxu0 %v549
    %716 = vmatprep.subr.mxu0 %v554
    %717 = vmatpush1.msra.mxu0 %v553
    %718 = vmatprep.subr.mxu0 %v558
    %719 = vmatpush1.msra.mxu0 %v557
    %720 = vmatprep.subr.mxu0 %v562
    %721 = vmatpush1.msra.mxu0 %v561
    %722 = vmatprep.subr.mxu0 %v566
    %723 = vmatpush1.msra.mxu0 %v565
    %724 = vmatprep.subr.mxu0 %v570
    %725 = vmatpush1.msra.mxu0 %v569
    %726 = vmatprep.subr.mxu0 %v574
    %727 = vmatpush1.msra.mxu0 %v573
    %728 = vmatprep.subr.mxu0 %v578
    %729 = vmatpush1.msra.mxu0 %v577
    %730 = vmatprep.subr.mxu0 %v582
    %731 = vmatpush1.msra.mxu0 %v581
    %732 = vmatprep.subr.mxu0 %v586
    %733 = vmatpush1.msra.mxu0 %v585
    %734 = vmatprep.subr.mxu0 %v590
    %735 = vmatpush1.msra.mxu0 %v589
    %736 = vmatprep.subr.mxu0 %v594
    %737 = vmatpush1.msra.mxu0 %v593
    %738 = vmatprep.subr.mxu0 0.0
    %739 = vmatpush1.msra.mxu0 0.0
    %740 = vmatprep.subr.mxu0 0.0
    %741 = vmatpush1.msra.mxu0 0.0
    %742 = vmatprep.subr.mxu0 0.0
    %743 = vmatpush1.msra.mxu0 0.0
    %744 = vmatprep.subr.mxu0 0.0
    %745 = vmatpush1.msra.mxu0 0.0
    %746 = vmatprep.subr.mxu0 0.0
    %747 = vmatpush1.msra.mxu0 0.0
    %748 = vmatprep.subr.mxu0 0.0
    %749 = vmatpush1.msra.mxu0 0.0
    %750 = vmatprep.subr.mxu0 0.0
    %751 = vmatpush1.msra.mxu0 0.0
    %752 = vmatprep.subr.mxu0 0.0
    %753 = vmatpush1.msra.mxu0 0.0
    %754 = vmatprep.subr.mxu0 0.0
    %755 = vmatpush1.msra.mxu0 0.0
    %756 = vmatprep.subr.mxu0 0.0
    %757 = vmatpush1.msra.mxu0 0.0
    %758 = vmatprep.subr.mxu0 0.0
    %759 = vmatpush1.msra.mxu0 0.0
    %760 = vmatprep.subr.mxu0 0.0
    %761 = vmatpush1.msra.mxu0 0.0
    %762 = vmatprep.subr.mxu0 0.0
    %763 = vmatpush1.msra.mxu0 0.0
    %764 = vmatprep.subr.mxu0 0.0
    %765 = vmatpush1.msra.mxu0 0.0
    %766 = vmatprep.subr.mxu0 0.0
    %767 = vmatpush1.msra.mxu0 0.0
    %768 = vmatprep.subr.mxu0 0.0
    %769 = vmatpush1.msra.mxu0 0.0
    %770 = vmatprep.mubr.f32.mxu0 0.0
    %771 = vmatmul.mubr.f32.gmra.mrb[0].mxu0 %v527
    %v772 = vpop.f32.mrb[0].mxu0
    %v773 = vadd.f32 %v608, %v772
    %v774 = vpop.f32.mrb[0].mxu0
    %v775 = vadd.f32 %v612, %v774
    %776 = vmatprep.mubr.f32.mxu0 0.0
    %777 = vmatmul.mubr.f32.gmra.mrb[0].mxu0 %v528
    %v778 = vpop.f32.mrb[0].mxu0
    %v779 = vadd.f32 %v608, %v778
    %v780 = vpop.f32.mrb[0].mxu0
    %v781 = vadd.f32 %v612, %v780
    %782 = vmatprep.mubr.f32.mxu0 0.0
    %783 = vmatmul.mubr.f32.gmra.mrb[0].mxu0 %v529
    %v784 = vpop.f32.mrb[0].mxu0
    %v785 = vadd.f32 %v608, %v784
    %v786 = vpop.f32.mrb[0].mxu0
    %v787 = vadd.f32 %v612, %v786
    %788 = vmatprep.mubr.f32.mxu0 0.0
    %789 = vmatmul.mubr.f32.gmra.mrb[0].mxu0 %v530
    %v790 = vpop.f32.mrb[0].mxu0
    %v791 = vadd.f32 %v608, %v790
    %v792 = vpop.f32.mrb[0].mxu0
    %v793 = vadd.f32 %v612, %v792
    %794 = vdwg.mxu0
    %v795 = vmul.f32 %v684, %v684
    %v796 = vmul.f32 %v686, %v686
    %v797 = vmul.f32 %v773, %v773
    %v798 = vmul.f32 %v775, %v775
    %v799 = vmul.f32 %v690, %v690
    %v800 = vmul.f32 %v692, %v692
    %v801 = vmul.f32 %v779, %v779
    %v802 = vmul.f32 %v781, %v781
    %v803 = vmul.f32 %v696, %v696
    %v804 = vmul.f32 %v698, %v698
    %v805 = vmul.f32 %v785, %v785
    %v806 = vmul.f32 %v787, %v787
    %v807 = vmul.f32 %v702, %v702
    %v808 = vmul.f32 %v704, %v704
    %v809 = vmul.f32 %v791, %v791
    %v810 = vmul.f32 %v793, %v793
    %v811 = vmul.f32 %v684, %v795
    %v812 = vmul.f32 %v686, %v796
    %v813 = vmul.f32 %v773, %v797
    %v814 = vmul.f32 %v775, %v798
    %v815 = vmul.f32 %v690, %v799
    %v816 = vmul.f32 %v692, %v800
    %v817 = vmul.f32 %v779, %v801
    %v818 = vmul.f32 %v781, %v802
    %v819 = vmul.f32 %v696, %v803
    %v820 = vmul.f32 %v698, %v804
    %v821 = vmul.f32 %v785, %v805
    %v822 = vmul.f32 %v787, %v806
    %v823 = vmul.f32 %v702, %v807
    %v824 = vmul.f32 %v704, %v808
    %v825 = vmul.f32 %v791, %v809
    %v826 = vmul.f32 %v793, %v810
    %v827 = vmul.f32 %v811, 0.044715
    %v828 = vmul.f32 %v812, 0.044715
    %v829 = vmul.f32 %v813, 0.044715
    %v830 = vmul.f32 %v814, 0.044715
    %v831 = vmul.f32 %v815, 0.044715
    %v832 = vmul.f32 %v816, 0.044715
    %v833 = vmul.f32 %v817, 0.044715
    %v834 = vmul.f32 %v818, 0.044715
    %v835 = vmul.f32 %v819, 0.044715
    %v836 = vmul.f32 %v820, 0.044715
    %v837 = vmul.f32 %v821, 0.044715
    %v838 = vmul.f32 %v822, 0.044715
    %v839 = vmul.f32 %v823, 0.044715
    %v840 = vmul.f32 %v824, 0.044715
    %v841 = vmul.f32 %v825, 0.044715
    %v842 = vmul.f32 %v826, 0.044715
    %v843 = vadd.f32 %v684, %v827
    %v844 = vadd.f32 %v686, %v828
    %v845 = vadd.f32 %v773, %v829
    %v846 = vadd.f32 %v775, %v830
    %v847 = vadd.f32 %v690, %v831
    %v848 = vadd.f32 %v692, %v832
    %v849 = vadd.f32 %v779, %v833
    %v850 = vadd.f32 %v781, %v834
    %v851 = vadd.f32 %v696, %v835
    %v852 = vadd.f32 %v698, %v836
    %v853 = vadd.f32 %v785, %v837
    %v854 = vadd.f32 %v787, %v838
    %v855 = vadd.f32 %v702, %v839
    %v856 = vadd.f32 %v704, %v840
    %v857 = vadd.f32 %v791, %v841
    %v858 = vadd.f32 %v793, %v842
    %v859 = vmul.f32 %v843, 0.7978846
    %v860 = vmul.f32 %v844, 0.7978846
    %v861 = vmul.f32 %v845, 0.7978846
    %v862 = vmul.f32 %v846, 0.7978846
    %v863 = vmul.f32 %v847, 0.7978846
    %v864 = vmul.f32 %v848, 0.7978846
    %v865 = vmul.f32 %v849, 0.7978846
    %v866 = vmul.f32 %v850, 0.7978846
    %v867 = vmul.f32 %v851, 0.7978846
    %v868 = vmul.f32 %v852, 0.7978846
    %v869 = vmul.f32 %v853, 0.7978846
    %v870 = vmul.f32 %v854, 0.7978846
    %v871 = vmul.f32 %v855, 0.7978846
    %v872 = vmul.f32 %v856, 0.7978846
    %v873 = vmul.f32 %v857, 0.7978846
    %v874 = vmul.f32 %v858, 0.7978846
    %v875 = vtanh.pop %v859
    %v876 = vtanh.pop %v860
    %v877 = vtanh.pop %v861
    %v878 = vtanh.pop %v862
    %v879 = vtanh.pop %v863
    %v880 = vtanh.pop %v864
    %v881 = vtanh.pop %v865
    %v882 = vtanh.pop %v866
    %v883 = vtanh.pop %v867
    %v884 = vtanh.pop %v868
    %v885 = vtanh.pop %v869
    %v886 = vtanh.pop %v870
    %v887 = vtanh.pop %v871
    %v888 = vtanh.pop %v872
    %v889 = vtanh.pop %v873
    %v890 = vtanh.pop %v874
    %v891 = vadd.f32 %v875, 1.0
    %v892 = vadd.f32 %v876, 1.0
    %v893 = vadd.f32 %v877, 1.0
    %v894 = vadd.f32 %v878, 1.0
    %v895 = vadd.f32 %v879, 1.0
    %v896 = vadd.f32 %v880, 1.0
    %v897 = vadd.f32 %v881, 1.0
    %v898 = vadd.f32 %v882, 1.0
    %v899 = vadd.f32 %v883, 1.0
    %v900 = vadd.f32 %v884, 1.0
    %v901 = vadd.f32 %v885, 1.0
    %v902 = vadd.f32 %v886, 1.0
    %v903 = vadd.f32 %v887, 1.0
    %v904 = vadd.f32 %v888, 1.0
    %v905 = vadd.f32 %v889, 1.0
    %v906 = vadd.f32 %v890, 1.0
    %v907 = vmul.f32 %v891, 0.5
    %v908 = vmul.f32 %v892, 0.5
    %v909 = vmul.f32 %v893, 0.5
    %v910 = vmul.f32 %v894, 0.5
    %v911 = vmul.f32 %v895, 0.5
    %v912 = vmul.f32 %v896, 0.5
    %v913 = vmul.f32 %v897, 0.5
    %v914 = vmul.f32 %v898, 0.5
    %v915 = vmul.f32 %v899, 0.5
    %v916 = vmul.f32 %v900, 0.5
    %v917 = vmul.f32 %v901, 0.5
    %v918 = vmul.f32 %v902, 0.5
    %v919 = vmul.f32 %v903, 0.5
    %v920 = vmul.f32 %v904, 0.5
    %v921 = vmul.f32 %v905, 0.5
    %v922 = vmul.f32 %v906, 0.5
    %v923 = vmul.f32 %v684, %v907
    %v924 = vmul.f32 %v686, %v908
    %v925 = vmul.f32 %v773, %v909
    %v926 = vmul.f32 %v775, %v910
    %v927 = vmul.f32 %v690, %v911
    %v928 = vmul.f32 %v692, %v912
    %v929 = vmul.f32 %v779, %v913
    %v930 = vmul.f32 %v781, %v914
    %v931 = vmul.f32 %v696, %v915
    %v932 = vmul.f32 %v698, %v916
    %v933 = vmul.f32 %v785, %v917
    %v934 = vmul.f32 %v787, %v918
    %v935 = vmul.f32 %v702, %v919
    %v936 = vmul.f32 %v704, %v920
    %v937 = vmul.f32 %v791, %v921
    %v938 = vmul.f32 %v793, %v922
    %v939 = vld [vmem:[#allocation10] sm:$0xff]
    %v940 = vld [vmem:[#allocation10 + $0x8] sm:$0xff]
    %v941 = vld [vmem:[#allocation10 + $0x10] sm:$0xff]
    %v942 = vld [vmem:[#allocation10 + $0x18] sm:$0xff]
    %v943 = vld [vmem:[#allocation10 + $0x20] sm:$0xff]
    %v944 = vld [vmem:[#allocation10 + $0x28] sm:$0xff]
    %v945 = vld [vmem:[#allocation10 + $0x30] sm:$0xff]
    %v946 = vld [vmem:[#allocation10 + $0x38] sm:$0xff]
    %v947 = vld [vmem:[#allocation10 + $0x40] sm:$0xff]
    %v948 = vld [vmem:[#allocation10 + $0x48] sm:$0xff]
    %v949 = vld [vmem:[#allocation10 + $0x50] sm:$0xff]
    %v950 = vld [vmem:[#allocation10 + $0x58] sm:$0xff]
    %v951 = vld [vmem:[#allocation10 + $0x60] sm:$0xff]
    %v952 = vld [vmem:[#allocation10 + $0x68] sm:$0xff]
    %v953 = vld [vmem:[#allocation10 + $0x70] sm:$0xff]
    %v954 = vld [vmem:[#allocation10 + $0x78] sm:$0xff]
    %v955 = vld [vmem:[#allocation10 + $0x80] sm:$0xff]
    %v956 = vld [vmem:[#allocation10 + $0x88] sm:$0xff]
    %v957 = vld [vmem:[#allocation10 + $0x90] sm:$0xff]
    %v958 = vld [vmem:[#allocation10 + $0x98] sm:$0xff]
    %v959 = vld [vmem:[#allocation10 + $0xa0] sm:$0xff]
    %v960 = vld [vmem:[#allocation10 + $0xa8] sm:$0xff]
    %v961 = vld [vmem:[#allocation10 + $0xb0] sm:$0xff]
    %v962 = vld [vmem:[#allocation10 + $0xb8] sm:$0xff]
    %v963 = vld [vmem:[#allocation10 + $0xc0] sm:$0xff]
    %v964 = vld [vmem:[#allocation10 + $0xc8] sm:$0xff]
    %v965 = vld [vmem:[#allocation10 + $0xd0] sm:$0xff]
    %v966 = vld [vmem:[#allocation10 + $0xd8] sm:$0xff]
    %v967 = vld [vmem:[#allocation10 + $0xe0] sm:$0xff]
    %v968 = vld [vmem:[#allocation10 + $0xe8] sm:$0xff]
    %v969 = vld [vmem:[#allocation10 + $0xf0] sm:$0xff]
    %v970 = vld [vmem:[#allocation10 + $0xf8] sm:$0xff]
    %v971 = vld [vmem:[#allocation10 + $0x100] sm:$0xff]
    %v972 = vld [vmem:[#allocation10 + $0x108] sm:$0xff]
    %v973 = vld [vmem:[#allocation10 + $0x110] sm:$0xff]
    %v974 = vld [vmem:[#allocation10 + $0x118] sm:$0xff]
    %v975 = vld [vmem:[#allocation10 + $0x120] sm:$0xff]
    %v976 = vld [vmem:[#allocation10 + $0x128] sm:$0xff]
    %v977 = vld [vmem:[#allocation10 + $0x130] sm:$0xff]
    %v978 = vld [vmem:[#allocation10 + $0x138] sm:$0xff]
    %v979 = vld [vmem:[#allocation10 + $0x140] sm:$0xff]
    %v980 = vld [vmem:[#allocation10 + $0x148] sm:$0xff]
    %v981 = vld [vmem:[#allocation10 + $0x150] sm:$0xff]
    %v982 = vld [vmem:[#allocation10 + $0x158] sm:$0xff]
    %v983 = vld [vmem:[#allocation10 + $0x160] sm:$0xff]
    %v984 = vld [vmem:[#allocation10 + $0x168] sm:$0xff]
    %v985 = vld [vmem:[#allocation10 + $0x170] sm:$0xff]
    %v986 = vld [vmem:[#allocation10 + $0x178] sm:$0xff]
    %v987 = vld [vmem:[#allocation10 + $0x180] sm:$0xff]
    %v988 = vld [vmem:[#allocation10 + $0x188] sm:$0xff]
    %v989 = vld [vmem:[#allocation10 + $0x190] sm:$0xff]
    %v990 = vld [vmem:[#allocation10 + $0x198] sm:$0xff]
    %v991 = vld [vmem:[#allocation10 + $0x1a0] sm:$0xff]
    %v992 = vld [vmem:[#allocation10 + $0x1a8] sm:$0xff]
    %v993 = vld [vmem:[#allocation10 + $0x1b0] sm:$0xff]
    %v994 = vld [vmem:[#allocation10 + $0x1b8] sm:$0xff]
    %v995 = vld [vmem:[#allocation10 + $0x1c0] sm:$0xff]
    %v996 = vld [vmem:[#allocation10 + $0x1c8] sm:$0xff]
    %v997 = vld [vmem:[#allocation10 + $0x1d0] sm:$0xff]
    %v998 = vld [vmem:[#allocation10 + $0x1d8] sm:$0xff]
    %v999 = vld [vmem:[#allocation10 + $0x1e0] sm:$0xff]
    %v1000 = vld [vmem:[#allocation10 + $0x1e8] sm:$0xff]
    %v1001 = vld [vmem:[#allocation10 + $0x1f0] sm:$0xff]
    %v1002 = vld [vmem:[#allocation10 + $0x1f8] sm:$0xff]
    %1003 = vmatprep.subr.mxu0 0.0
    %1004 = vmatpush1.msra.mxu0 %v939
    %1005 = vmatprep.subr.mxu0 0.0
    %1006 = vmatpush1.msra.mxu0 %v940
    %1007 = vmatprep.subr.mxu0 0.0
    %1008 = vmatpush1.msra.mxu0 %v941
    %1009 = vmatprep.subr.mxu0 0.0
    %1010 = vmatpush1.msra.mxu0 %v942
    %1011 = vmatprep.subr.mxu0 0.0
    %1012 = vmatpush1.msra.mxu0 %v943
    %1013 = vmatprep.subr.mxu0 0.0
    %1014 = vmatpush1.msra.mxu0 %v944
    %1015 = vmatprep.subr.mxu0 0.0
    %1016 = vmatpush1.msra.mxu0 %v945
    %1017 = vmatprep.subr.mxu0 0.0
    %1018 = vmatpush1.msra.mxu0 %v946
    %1019 = vmatprep.subr.mxu0 0.0
    %1020 = vmatpush1.msra.mxu0 %v947
    %1021 = vmatprep.subr.mxu0 0.0
    %1022 = vmatpush1.msra.mxu0 %v948
    %1023 = vmatprep.subr.mxu0 0.0
    %1024 = vmatpush1.msra.mxu0 %v949
    %1025 = vmatprep.subr.mxu0 0.0
    %1026 = vmatpush1.msra.mxu0 %v950
    %1027 = vmatprep.subr.mxu0 0.0
    %1028 = vmatpush1.msra.mxu0 %v951
    %1029 = vmatprep.subr.mxu0 0.0
    %1030 = vmatpush1.msra.mxu0 %v952
    %1031 = vmatprep.subr.mxu0 0.0
    %1032 = vmatpush1.msra.mxu0 %v953
    %1033 = vmatprep.subr.mxu0 0.0
    %1034 = vmatpush1.msra.mxu0 %v954
    %1035 = vmatprep.subr.mxu0 0.0
    %1036 = vmatpush1.msra.mxu0 %v955
    %1037 = vmatprep.subr.mxu0 0.0
    %1038 = vmatpush1.msra.mxu0 %v956
    %1039 = vmatprep.subr.mxu0 0.0
    %1040 = vmatpush1.msra.mxu0 %v957
    %1041 = vmatprep.subr.mxu0 0.0
    %1042 = vmatpush1.msra.mxu0 %v958
    %1043 = vmatprep.subr.mxu0 0.0
    %1044 = vmatpush1.msra.mxu0 %v959
    %1045 = vmatprep.subr.mxu0 0.0
    %1046 = vmatpush1.msra.mxu0 %v960
    %1047 = vmatprep.subr.mxu0 0.0
    %1048 = vmatpush1.msra.mxu0 %v961
    %1049 = vmatprep.subr.mxu0 0.0
    %1050 = vmatpush1.msra.mxu0 %v962
    %1051 = vmatprep.subr.mxu0 0.0
    %1052 = vmatpush1.msra.mxu0 %v963
    %1053 = vmatprep.subr.mxu0 0.0
    %1054 = vmatpush1.msra.mxu0 %v964
    %1055 = vmatprep.subr.mxu0 0.0
    %1056 = vmatpush1.msra.mxu0 %v965
    %1057 = vmatprep.subr.mxu0 0.0
    %1058 = vmatpush1.msra.mxu0 %v966
    %1059 = vmatprep.subr.mxu0 0.0
    %1060 = vmatpush1.msra.mxu0 %v967
    %1061 = vmatprep.subr.mxu0 0.0
    %1062 = vmatpush1.msra.mxu0 %v968
    %1063 = vmatprep.subr.mxu0 0.0
    %1064 = vmatpush1.msra.mxu0 %v969
    %1065 = vmatprep.subr.mxu0 0.0
    %1066 = vmatpush1.msra.mxu0 %v970
    %1067 = vmatprep.mubr.f32.mxu0 %v924
    %1068 = vmatmul.mubr.f32.gmra.mrb[0].mxu0 %v923
    %v1069 = vpop.f32.mrb[0].mxu0
    %v1070 = vadd.f32 0.0, %v1069
    %v1071 = vpop.f32.mrb[0].mxu0
    %1072 = vmatprep.mubr.f32.mxu0 %v928
    %1073 = vmatmul.mubr.f32.gmra.mrb[0].mxu0 %v927
    %v1074 = vpop.f32.mrb[0].mxu0
    %v1075 = vadd.f32 0.0, %v1074
    %v1076 = vpop.f32.mrb[0].mxu0
    %1077 = vmatprep.mubr.f32.mxu0 %v932
    %1078 = vmatmul.mubr.f32.gmra.mrb[0].mxu0 %v931
    %v1079 = vpop.f32.mrb[0].mxu0
    %v1080 = vadd.f32 0.0, %v1079
    %v1081 = vpop.f32.mrb[0].mxu0
    %1082 = vmatprep.mubr.f32.mxu0 %v936
    %1083 = vmatmul.mubr.f32.gmra.mrb[0].mxu0 %v935
    %v1084 = vpop.f32.mrb[0].mxu0
    %v1085 = vadd.f32 0.0, %v1084
    %v1086 = vpop.f32.mrb[0].mxu0
    %1087 = vdwg.mxu0
    %1088 = vmatprep.subr.mxu0 0.0
    %1089 = vmatpush1.msra.mxu0 %v971
    %1090 = vmatprep.subr.mxu0 0.0
    %1091 = vmatpush1.msra.mxu0 %v972
    %1092 = vmatprep.subr.mxu0 0.0
    %1093 = vmatpush1.msra.mxu0 %v973
    %1094 = vmatprep.subr.mxu0 0.0
    %1095 = vmatpush1.msra.mxu0 %v974
    %1096 = vmatprep.subr.mxu0 0.0
    %1097 = vmatpush1.msra.mxu0 %v975
    %1098 = vmatprep.subr.mxu0 0.0
    %1099 = vmatpush1.msra.mxu0 %v976
    %1100 = vmatprep.subr.mxu0 0.0
    %1101 = vmatpush1.msra.mxu0 %v977
    %1102 = vmatprep.subr.mxu0 0.0
    %1103 = vmatpush1.msra.mxu0 %v978
    %1104 = vmatprep.subr.mxu0 0.0
    %1105 = vmatpush1.msra.mxu0 %v979
    %1106 = vmatprep.subr.mxu0 0.0
    %1107 = vmatpush1.msra.mxu0 %v980
    %1108 = vmatprep.subr.mxu0 0.0
    %1109 = vmatpush1.msra.mxu0 %v981
    %1110 = vmatprep.subr.mxu0 0.0
    %1111 = vmatpush1.msra.mxu0 %v982
    %1112 = vmatprep.subr.mxu0 0.0
    %1113 = vmatpush1.msra.mxu0 %v983
    %1114 = vmatprep.subr.mxu0 0.0
    %1115 = vmatpush1.msra.mxu0 %v984
    %1116 = vmatprep.subr.mxu0 0.0
    %1117 = vmatpush1.msra.mxu0 %v985
    %1118 = vmatprep.subr.mxu0 0.0
    %1119 = vmatpush1.msra.mxu0 %v986
    %1120 = vmatprep.subr.mxu0 0.0
    %1121 = vmatpush1.msra.mxu0 %v987
    %1122 = vmatprep.subr.mxu0 0.0
    %1123 = vmatpush1.msra.mxu0 %v988
    %1124 = vmatprep.subr.mxu0 0.0
    %1125 = vmatpush1.msra.mxu0 %v989
    %1126 = vmatprep.subr.mxu0 0.0
    %1127 = vmatpush1.msra.mxu0 %v990
    %1128 = vmatprep.subr.mxu0 0.0
    %1129 = vmatpush1.msra.mxu0 %v991
    %1130 = vmatprep.subr.mxu0 0.0
    %1131 = vmatpush1.msra.mxu0 %v992
    %1132 = vmatprep.subr.mxu0 0.0
    %1133 = vmatpush1.msra.mxu0 %v993
    %1134 = vmatprep.subr.mxu0 0.0
    %1135 = vmatpush1.msra.mxu0 %v994
    %1136 = vmatprep.subr.mxu0 0.0
    %1137 = vmatpush1.msra.mxu0 %v995
    %1138 = vmatprep.subr.mxu0 0.0
    %1139 = vmatpush1.msra.mxu0 %v996
    %1140 = vmatprep.subr.mxu0 0.0
    %1141 = vmatpush1.msra.mxu0 %v997
    %1142 = vmatprep.subr.mxu0 0.0
    %1143 = vmatpush1.msra.mxu0 %v998
    %1144 = vmatprep.subr.mxu0 0.0
    %1145 = vmatpush1.msra.mxu0 %v999
    %1146 = vmatprep.subr.mxu0 0.0
    %1147 = vmatpush1.msra.mxu0 %v1000
    %1148 = vmatprep.subr.mxu0 0.0
    %1149 = vmatpush1.msra.mxu0 %v1001
    %1150 = vmatprep.subr.mxu0 0.0
    %1151 = vmatpush1.msra.mxu0 %v1002
    %1152 = vmatprep.mubr.f32.mxu0 %v926
    %1153 = vmatmul.mubr.f32.gmra.mrb[0].mxu0 %v925
    %v1154 = vpop.f32.mrb[0].mxu0
    %v1155 = vadd.f32 %v1070, %v1154
    %v1156 = vpop.f32.mrb[0].mxu0
    %1157 = vmatprep.mubr.f32.mxu0 %v930
    %1158 = vmatmul.mubr.f32.gmra.mrb[0].mxu0 %v929
    %v1159 = vpop.f32.mrb[0].mxu0
    %v1160 = vadd.f32 %v1075, %v1159
    %v1161 = vpop.f32.mrb[0].mxu0
    %1162 = vmatprep.mubr.f32.mxu0 %v934
    %1163 = vmatmul.mubr.f32.gmra.mrb[0].mxu0 %v933
    %v1164 = vpop.f32.mrb[0].mxu0
    %v1165 = vadd.f32 %v1080, %v1164
    %v1166 = vpop.f32.mrb[0].mxu0
    %1167 = vmatprep.mubr.f32.mxu0 %v938
    %1168 = vmatmul.mubr.f32.gmra.mrb[0].mxu0 %v937
    %v1169 = vpop.f32.mrb[0].mxu0
    %v1170 = vadd.f32 %v1085, %v1169
    %v1171 = vpop.f32.mrb[0].mxu0
    %1172 = vdwg.mxu0
    %v1173 = vadd.f32 %v325, %v1155
    %v1174 = vadd.f32 %v326, %v1160
    %v1175 = vadd.f32 %v327, %v1165
    %v1176 = vadd.f32 %v328, %v1170
    %v1177 = vlaneseq
    %v1178 = vshrl.u32 %v1177, 7
    %v1179 = vsub.s32 4, %v1178
    %v1180 = vrot.slane %v122, %v1179
    %v1181 = vadd.f32 %v1173, %v1180
    %v1182 = vadd.f32 %v1174, %v1180
    %v1183 = vadd.f32 %v1175, %v1180
    %v1184 = vadd.f32 %v1176, %v1180
    %1185 = vst [vmem:[#allocation13] sm:$0xff] %v1181
    %1186 = vst [vmem:[#allocation13 + $0x8] sm:$0xff] %v1182
    %1187 = vst [vmem:[#allocation13 + $0x10] sm:$0xff] %v1183
    %1188 = vst [vmem:[#allocation13 + $0x18] sm:$0xff] %v1184
    // Predicated region
    $region50: #{tpu_custom_call.1} parent=1 // pred_check
      _
    $region51: #{tpu_custom_call.1} parent=1 // pred_check_branch
      %1190 = sbr.rel (0) target = $region53
    $region52: #{tpu_custom_call.1} parent=1 // pred_region
      %s1192 = ssub.s32 512, 512
      %1193 = vsyncadd [#allocation4], %s1192
      %s1194 = sshll.u32 [#allocation13], 4
      %s1195 = int_to_ptr.vmem [resolvable:$true] %s1194
      %1200 = dma.vmem_to_hbm [thread:$0]  %s1195, 512, %s6, [#allocation4], 128, 128, 8
    $region53: #{tpu_custom_call.1} parent=1 // pred_fallthru
      _
    // Predicated region
    $region54: #{tpu_custom_call.1} parent=1 // pred_check
      _
    $region55: #{tpu_custom_call.1} parent=1 // pred_check_branch
      %1202 = sbr.rel (0) target = $region57
    $region56: #{tpu_custom_call.1} parent=1 // pred_region
      %1203 = dma.done [#allocation4], 512
    $region57: #{tpu_custom_call.1} parent=1 // pred_fallthru
      _
    %1204 = vsyncpa [#allocation3], 1
    %1205 = vsyncpa [#allocation6], 1
    %1206 = vsyncpa [#allocation9], 1
    %1207 = vsyncpa [#allocation12], 1
    %1208 = vsyncpa [#allocation4], 1

</llo_original>
